<compile_context>
chip_gen: v7x
topology: tpu7x:2x2x1
jax: 0.10.0
libtpu: 0.0.40
codegen_flags: <defaults>
</compile_context>

<pallas_src>
import functools

import jax
import jax.numpy as jnp
from jax.experimental import pallas as pl
from jax.experimental.pallas import tpu as pltpu


def _psycho_ce_kernel(x_ref, y_ref, out_ref, sumsq_ref, sel_ref, *,
                      n_true, c_true, tn, tc):
    i = pl.program_id(0)          # batch-tile index  ("parallel")
    k = pl.program_id(1)          # class-tile index  ("arbitrary", reduction)
    nk = pl.num_programs(1)

    @pl.when(k == 0)
    def _init():
        sumsq_ref[...] = jnp.zeros_like(sumsq_ref)
        sel_ref[...] = jnp.zeros_like(sel_ref)

    x = x_ref[...].astype(jnp.float32)                       # (tn, tc)
    # shift the per-row label instead of offsetting the full-tile iota
    y_local = y_ref[...] - k * tc                            # (tn, 1) int32
    local_iota = jax.lax.broadcasted_iota(jnp.int32, x.shape, 1)   # (tn, tc)

    # Target-class select: out-of-range tail columns (>= c_true > y) can never
    # match a valid label, so no tail mask is needed on this path.
    sel_ref[...] += jnp.sum(jnp.where(local_iota == y_local, x, 0.0),
                            axis=1, keepdims=True)           # (tn, 1)

    ragged_c = (c_true % tc) != 0
    if ragged_c:
        # Only the last class tile carries garbage tail columns; mask only there
        # (and only for the sum-of-squares path).
        @pl.when(k != nk - 1)
        def _acc_full():
            sumsq_ref[...] += jnp.sum(x * x, axis=1, keepdims=True)

        @pl.when(k == nk - 1)
        def _acc_tail():
            xm = jnp.where(local_iota < (c_true - k * tc), x, 0.0)
            sumsq_ref[...] += jnp.sum(xm * xm, axis=1, keepdims=True)
    else:
        sumsq_ref[...] += jnp.sum(x * x, axis=1, keepdims=True)

    @pl.when(k == nk - 1)
    def _finalize():
        # rsqrt(max(sumsq, 1e-24)) == 1 / max(norm, 1e-12)  (F.normalize eps)
        inv = jax.lax.rsqrt(jnp.maximum(sumsq_ref[...], 1e-24))     # (tn, 1)
        row_log = jnp.log(sel_ref[...] * inv + 1e-5)                 # (tn, 1)
        # mask rows past the true batch size (ragged batch tail).  Keep the
        # select (jnp.where) — it stops NaNs from garbage rows leaking.
        row_idx = i * tn + jax.lax.broadcasted_iota(jnp.int32, row_log.shape, 0)
        row_log = jnp.where(row_idx < n_true, row_log, 0.0)
        tile_sum = jnp.sum(row_log)                                  # scalar
        # lane-dense partial-sum store (unmasked vst)
        out_ref[...] = jnp.broadcast_to(tile_sum, out_ref.shape).astype(jnp.float32)


def _round_up(v, m):
    return ((v + m - 1) // m) * m


def _pick_tiles(n, c, itemsize, block_bytes):
    """dtype/VMEM-aware tiles: grow class (lane) dim first toward `block_bytes`."""
    # Batch tile: cap at 256 rows, but split into near-equal multiple-of-8 tiles
    # so a "parallel" batch axis gives balanced work to v7x's two TensorCores.
    max_tn = 256
    if n <= max_tn:
        tn = n
    else:
        n_tiles = pl.cdiv(n, max_tn)
        tn = min(max_tn, _round_up(pl.cdiv(n, n_tiles), 8))

    # Class tile: whole C if it fits the budget, else the multiple of 128 under
    # the budget that minimizes padding waste (cdiv(C, tc) * tc - C).
    max_tc = max(128, block_bytes // (tn * itemsize))
    if c <= max_tc:
        tc = c
    else:
        cand = (max_tc // 128) * 128
        best_tc, best_waste = cand, None
        for t in range(cand, 127, -128):
            waste = pl.cdiv(c, t) * t - c
            if best_waste is None or waste < best_waste:
                best_tc, best_waste = t, waste
            if waste == 0:
                break
        tc = best_tc
    return tn, tc


def psycho_cross_entropy(x, y, num_classes=None, *, block_bytes=8 << 20):
    """x: (N, C) float (any float dtype), y: (N,) int labels. Returns scalar f32 loss."""
    n, c = x.shape
    if num_classes is None:
        num_classes = c
    assert num_classes == c, "kernel assumes x's class dim == num_classes"

    itemsize = jnp.dtype(x.dtype).itemsize
    tn, tc = _pick_tiles(n, c, itemsize, block_bytes)
    grid = (pl.cdiv(n, tn), pl.cdiv(c, tc))
    num_n_tiles = grid[0]

    y2 = y.astype(jnp.int32).reshape(n, 1)

    kernel = functools.partial(_psycho_ce_kernel,
                               n_true=n, c_true=c, tn=tn, tc=tc)

    x_block_bytes = tn * tc * itemsize
    # 2x double-buffered x block + out/scratch/labels + generous headroom;
    # stays well under v7x's 64 MiB/TC VMEM for the default 8 MiB block target.
    vmem_limit = int(min(2 * x_block_bytes + (16 << 20), 96 << 20))

    cost = pl.CostEstimate(
        flops=7 * n * c,                       # iota cmp/select + mul/add sumsq (+cast)
        transcendentals=2 * n,                 # per-row rsqrt + log
        bytes_accessed=n * c * itemsize + n * 4 + num_n_tiles * 8 * 128 * 4,
    )

    partials = pl.pallas_call(
        kernel,
        out_shape=jax.ShapeDtypeStruct((num_n_tiles, 8, 128), jnp.float32),
        grid_spec=pltpu.PrefetchScalarGridSpec(
            num_scalar_prefetch=0,
            grid=grid,
            in_specs=[
                pl.BlockSpec((tn, tc), lambda i, k: (i, k)),   # x tile (native dtype)
                pl.BlockSpec((tn, 1), lambda i, k: (i, 0)),    # labels (k-invariant)
            ],
            out_specs=pl.BlockSpec((1, 8, 128), lambda i, k: (i, 0, 0)),
            scratch_shapes=[
                pltpu.VMEM((tn, 1), jnp.float32),  # sum of squares per row
                pltpu.VMEM((tn, 1), jnp.float32),  # selected (target-class) value per row
            ],
        ),
        compiler_params=pltpu.CompilerParams(
            dimension_semantics=("parallel", "arbitrary"),
            vmem_limit_bytes=vmem_limit,
        ),
        cost_estimate=cost,
    )(x, y2)

    # partial sums are replicated across the (8,128) slab of each batch tile
    return -(jnp.sum(partials[:, 0, 0]) / n)


def _reference(x, y, num_classes):
    x = x.astype(jnp.float32)
    norm = jnp.sqrt(jnp.sum(x * x, axis=1, keepdims=True))
    xn = x / jnp.maximum(norm, 1e-12)
    logx = jnp.log(xn + 1e-5)
    onehot = jax.nn.one_hot(y, num_classes, dtype=jnp.float32)
    return -jnp.mean(jnp.sum(onehot * logx, axis=1))


if __name__ == "__main__":
    key = jax.random.PRNGKey(0)

    # --- main (small) test: batch=8, num_classes=32 ---
    kx, ky, key = jax.random.split(key, 3)
    N, C = 8, 32
    x = jax.random.uniform(kx, (N, C), jnp.float32, minval=0.1, maxval=1.0)
    y = jax.random.randint(ky, (N,), 0, C)

    loss = psycho_cross_entropy(x, y, num_classes=C)
    jax.block_until_ready(loss)
    ref = _reference(x, y, C)
    assert jnp.allclose(loss, ref, rtol=1e-5, atol=1e-5), (loss, ref)

    # --- tiling test: multiple batch tiles + whole-C class tile ---
    kx2, ky2, key = jax.random.split(key, 3)
    N2, C2 = 260, 2100
    x2 = jax.random.uniform(kx2, (N2, C2), jnp.float32, minval=0.1, maxval=1.0)
    y2 = jax.random.randint(ky2, (N2,), 0, C2)

    loss2 = psycho_cross_entropy(x2, y2, num_classes=C2)
    jax.block_until_ready(loss2)
    ref2 = _reference(x2, y2, C2)
    assert jnp.allclose(loss2, ref2, rtol=1e-4, atol=1e-5), (loss2, ref2)

    # --- small-block test: forces multiple class tiles + ragged class tail ---
    kx3, ky3 = jax.random.split(key)
    x3 = jax.random.uniform(kx3, (N2, C2), jnp.float32, minval=0.1, maxval=1.0)
    y3 = jax.random.randint(ky3, (N2,), 0, C2)

    loss3 = psycho_cross_entropy(x3, y3, num_classes=C2, block_bytes=512 * 1024)
    jax.block_until_ready(loss3)
    ref3 = _reference(x3, y3, C2)
    assert jnp.allclose(loss3, ref3, rtol=1e-4, atol=1e-5), (loss3, ref3)

    print("KERNEL_OK")
</pallas_src>

<mosaic_0001>
module attributes {stable_mosaic.version = 11 : i64} {
  func.func @_psycho_ce_kernel(%arg0: i32, %arg1: i32, %arg2: memref<8x32xf32, #tpu.memory_space<vmem>>, %arg3: memref<8x1xi32, #tpu.memory_space<vmem>>, %arg4: memref<1x8x128xf32, #tpu.memory_space<vmem>>, %arg5: memref<8x1xf32, #tpu.memory_space<vmem>>, %arg6: memref<8x1xf32, #tpu.memory_space<vmem>>) attributes {dimension_semantics = [#tpu.dimension_semantics<parallel>, #tpu.dimension_semantics<arbitrary>], iteration_bounds = array<i64: 1, 1>, scalar_prefetch = 0 : i64, scratch_operands = 2 : i64, tpu.core_type = #tpu.core_type<tc>, window_params = [{transform_indices = @transform_0, window_bounds = array<i64: 8, 32>}, {transform_indices = @transform_1, window_bounds = array<i64: 8, 1>}, {transform_indices = @transform_2, window_bounds = array<i64: 1, 8, 128>}]} {
    %c0_i32 = arith.constant 0 : i32
    %0 = arith.cmpi eq, %arg1, %c0_i32 : i32
    %1 = arith.extui %0 : i1 to i32
    %c0_i32_0 = arith.constant 0 : i32
    %2 = arith.cmpi ne, %1, %c0_i32_0 : i32
    scf.if %2 {
      %cst_16 = arith.constant 0.000000e+00 : f32
      %27 = vector.broadcast %cst_16 : f32 to vector<8x1xf32>
      %c0_17 = arith.constant 0 : index
      %c0_18 = arith.constant 0 : index
      %28 = vector.load %arg5[%c0_17, %c0_18] : memref<8x1xf32, #tpu.memory_space<vmem>>, vector<8x1xf32>
      tpu.vector_store %arg5[%c0_17, %c0_18], %27 {strides = array<i32>} : memref<8x1xf32, #tpu.memory_space<vmem>>, vector<8x1xf32>,
      %cst_19 = arith.constant 0.000000e+00 : f32
      %29 = vector.broadcast %cst_19 : f32 to vector<8x1xf32>
      %c0_20 = arith.constant 0 : index
      %c0_21 = arith.constant 0 : index
      %30 = vector.load %arg6[%c0_20, %c0_21] : memref<8x1xf32, #tpu.memory_space<vmem>>, vector<8x1xf32>
      tpu.vector_store %arg6[%c0_20, %c0_21], %29 {strides = array<i32>} : memref<8x1xf32, #tpu.memory_space<vmem>>, vector<8x1xf32>,
    } else {
    }
    %c0 = arith.constant 0 : index
    %c0_1 = arith.constant 0 : index
    %3 = vector.load %arg2[%c0, %c0_1] : memref<8x32xf32, #tpu.memory_space<vmem>>, vector<8x32xf32>
    %c0_2 = arith.constant 0 : index
    %c0_3 = arith.constant 0 : index
    %4 = vector.load %arg3[%c0_2, %c0_3] : memref<8x1xi32, #tpu.memory_space<vmem>>, vector<8x1xi32>
    %c32_i32 = arith.constant 32 : i32
    %5 = arith.muli %arg1, %c32_i32 : i32
    %6 = vector.broadcast %5 : i32 to vector<8x1xi32>
    %7 = arith.subi %4, %6 : vector<8x1xi32>
    %8 = tpu.iota {dimensions = array<i32: 1>} : vector<8x32xi32>
    %c0_4 = arith.constant 0 : index
    %c0_5 = arith.constant 0 : index
    %9 = vector.load %arg6[%c0_4, %c0_5] : memref<8x1xf32, #tpu.memory_space<vmem>>, vector<8x1xf32>
    %10 = vector.broadcast %7 : vector<8x1xi32> to vector<8x32xi32>
    %11 = arith.cmpi eq, %8, %10 : vector<8x32xi32>
    %cst = arith.constant 0.000000e+00 : f32
    %12 = vector.broadcast %cst : f32 to vector<8x32xf32>
    %13 = arith.select %11, %3, %12 : vector<8x32xi1>, vector<8x32xf32>
    %cst_6 = arith.constant dense<0.000000e+00> : vector<8xf32>
    %14 = vector.multi_reduction <add>, %13, %cst_6 [1] : vector<8x32xf32> to vector<8xf32>
    %15 = vector.shape_cast %14 : vector<8xf32> to vector<8x1xf32>
    %16 = arith.addf %9, %15 : vector<8x1xf32>
    %c0_7 = arith.constant 0 : index
    %c0_8 = arith.constant 0 : index
    %17 = vector.load %arg6[%c0_7, %c0_8] : memref<8x1xf32, #tpu.memory_space<vmem>>, vector<8x1xf32>
    tpu.vector_store %arg6[%c0_7, %c0_8], %16 {strides = array<i32>} : memref<8x1xf32, #tpu.memory_space<vmem>>, vector<8x1xf32>,
    %c0_9 = arith.constant 0 : index
    %c0_10 = arith.constant 0 : index
    %18 = vector.load %arg5[%c0_9, %c0_10] : memref<8x1xf32, #tpu.memory_space<vmem>>, vector<8x1xf32>
    %19 = arith.mulf %3, %3 : vector<8x32xf32>
    %cst_11 = arith.constant dense<0.000000e+00> : vector<8xf32>
    %20 = vector.multi_reduction <add>, %19, %cst_11 [1] : vector<8x32xf32> to vector<8xf32>
    %21 = vector.shape_cast %20 : vector<8xf32> to vector<8x1xf32>
    %22 = arith.addf %18, %21 : vector<8x1xf32>
    %c0_12 = arith.constant 0 : index
    %c0_13 = arith.constant 0 : index
    %23 = vector.load %arg5[%c0_12, %c0_13] : memref<8x1xf32, #tpu.memory_space<vmem>>, vector<8x1xf32>
    tpu.vector_store %arg5[%c0_12, %c0_13], %22 {strides = array<i32>} : memref<8x1xf32, #tpu.memory_space<vmem>>, vector<8x1xf32>,
    %c0_i32_14 = arith.constant 0 : i32
    %24 = arith.cmpi eq, %arg1, %c0_i32_14 : i32
    %25 = arith.extui %24 : i1 to i32
    %c0_i32_15 = arith.constant 0 : i32
    %26 = arith.cmpi ne, %25, %c0_i32_15 : i32
    scf.if %26 {
      %c0_16 = arith.constant 0 : index
      %c0_17 = arith.constant 0 : index
      %27 = vector.load %arg5[%c0_16, %c0_17] : memref<8x1xf32, #tpu.memory_space<vmem>>, vector<8x1xf32>
      %cst_18 = arith.constant 1.000000e-24 : f32
      %28 = vector.broadcast %cst_18 : f32 to vector<8x1xf32>
      %29 = arith.maximumf %27, %28 : vector<8x1xf32>
      %30 = math.rsqrt %29 : vector<8x1xf32>
      %c0_19 = arith.constant 0 : index
      %c0_20 = arith.constant 0 : index
      %31 = vector.load %arg6[%c0_19, %c0_20] : memref<8x1xf32, #tpu.memory_space<vmem>>, vector<8x1xf32>
      %32 = arith.mulf %31, %30 : vector<8x1xf32>
      %cst_21 = arith.constant 9.99999974E-6 : f32
      %33 = vector.broadcast %cst_21 : f32 to vector<8x1xf32>
      %34 = arith.addf %32, %33 : vector<8x1xf32>
      %35 = math.log %34 : vector<8x1xf32>
      %c8_i32 = arith.constant 8 : i32
      %36 = arith.muli %arg0, %c8_i32 : i32
      %37 = tpu.iota {dimensions = array<i32: 0>} : vector<8x1xi32>
      %38 = vector.broadcast %36 : i32 to vector<8x1xi32>
      %39 = arith.addi %38, %37 : vector<8x1xi32>
      %c8_i32_22 = arith.constant 8 : i32
      %40 = vector.broadcast %c8_i32_22 : i32 to vector<8x1xi32>
      %41 = arith.cmpi slt, %39, %40 : vector<8x1xi32>
      %cst_23 = arith.constant 0.000000e+00 : f32
      %42 = vector.broadcast %cst_23 : f32 to vector<8x1xf32>
      %43 = arith.select %41, %35, %42 : vector<8x1xi1>, vector<8x1xf32>
      %44 = vector.shape_cast %43 : vector<8x1xf32> to vector<1x8x1xf32>
      %cst_24 = arith.constant dense<0.000000e+00> : vector<1xf32>
      %45 = vector.multi_reduction <add>, %44, %cst_24 [1, 2] : vector<1x8x1xf32> to vector<1xf32>
      %46 = vector.shape_cast %45 : vector<1xf32> to vector<1x1x1xf32>
      %47 = vector.extract %46[0, 0, 0] : f32 from vector<1x1x1xf32>
      %48 = vector.broadcast %47 : f32 to vector<1x8x128xf32>
      %c0_25 = arith.constant 0 : index
      %c0_26 = arith.constant 0 : index
      %c0_27 = arith.constant 0 : index
      %49 = vector.load %arg4[%c0_25, %c0_26, %c0_27] : memref<1x8x128xf32, #tpu.memory_space<vmem>>, vector<1x8x128xf32>
      tpu.vector_store %arg4[%c0_25, %c0_26, %c0_27], %48 {strides = array<i32>} : memref<1x8x128xf32, #tpu.memory_space<vmem>>, vector<1x8x128xf32>,
    } else {
    }
    return
  }
  func.func @transform_0(%arg0: i32, %arg1: i32) -> (i32, i32) {
    %c0_i32 = arith.constant 0 : i32
    return %arg0, %arg1 : i32, i32
  }
  func.func @transform_1(%arg0: i32, %arg1: i32) -> (i32, i32) {
    %c0_i32 = arith.constant 0 : i32
    %c0_i32_0 = arith.constant 0 : i32
    return %arg0, %c0_i32 : i32, i32
  }
  func.func @transform_2(%arg0: i32, %arg1: i32) -> (i32, i32, i32) {
    %c0_i32 = arith.constant 0 : i32
    %c0_i32_0 = arith.constant 0 : i32
    %c0_i32_1 = arith.constant 0 : i32
    return %arg0, %c0_i32, %c0_i32_0 : i32, i32, i32
  }
}

</mosaic_0001>

<llo_original>
// kernel: tpu_custom_call.1
$region0: #{tpu_custom_call.1}
  #allocation0 [shape = 'u32[]', space=smem, size = 0x4, offset = 0x4, fixed_abs, tag = 'smem constant byte address 0x4 - core index']
  #allocation1 [shape = 'u32[144,128]{1,0:T(1,128)}', space=vmem, size = 0x12000, scoped, tag = 'internal scratch']
  #allocation2 [shape = 'f32[8,1]{1,0:T(8,128)}', space=vmem, size = 0x1000, scoped, tag = 'scratch operand']
  #allocation3 [shape = 'f32[8,1]{1,0:T(8,128)}', space=vmem, size = 0x1000, scoped, tag = 'scratch operand']
  %s0 = inlined_call_operand.vmem [shape: f32[8,32], index: 0, kind: input, shape index: {}]
  %s1 = inlined_call_operand.vmem [shape: s32[8,1], index: 1, kind: input, shape index: {}]
  %s2 = inlined_call_operand.hbm [shape: f32[1,8,128], index: 2, kind: output, shape index: {}]
  %s3 = sld [smem:[#allocation0]]
  $region26: #{tpu_custom_call.1} parent=0
    _
  %s5 = ssub.s32 1, %s3
  %s6 = scalar_select 0, %s5, %s3
  $region1: #{tpu_custom_call.1} parent=0
    #allocation4 [shape = 'u8[4096]{0}', space=vmem, size = 0x1000, scoped, tag = 'output window, operand 0, single buffered']
    #allocation5 [shape = 's32[1]{0}', space=sflag, size = 0x4, scoped, tag = 'scoped memory for tpu_custom_call.1']
    %7 = vsyncpa [#allocation5], 0
    // Predicated region
    $region2: #{tpu_custom_call.1} parent=1 // pred_check
      _
    $region3: #{tpu_custom_call.1} parent=1 // pred_check_branch
      %9 = sbr.rel (0) target = $region5
    $region4: #{tpu_custom_call.1} parent=1 // pred_region
      _
    $region5: #{tpu_custom_call.1} parent=1 // pred_fallthru
      _
    // Predicated region
    $region6: #{tpu_custom_call.1} parent=1 // pred_check
      _
    $region7: #{tpu_custom_call.1} parent=1 // pred_check_branch
      %11 = sbr.rel (0) target = $region9
    $region8: #{tpu_custom_call.1} parent=1 // pred_region
      _
    $region9: #{tpu_custom_call.1} parent=1 // pred_fallthru
      _
    %p12 = scmp.eq.s32.totalorder 0, 0
    // Predicated region
    $region10: #{tpu_custom_call.1} parent=1 // pred_check
      %p13 = pneg %p12
    $region11: #{tpu_custom_call.1} parent=1 // pred_check_branch
      %15 = sbr.rel (%p13) target = $region13
    $region12: #{tpu_custom_call.1} parent=1 // pred_region
      %vm16 = vcmask 7168
      %17 = vst.msk [vmem:[#allocation2] sm:$0xff] %vm16, 0.0
      %18 = vst.msk [vmem:[#allocation3] sm:$0xff] %vm16, 0.0
    $region13: #{tpu_custom_call.1} parent=1 // pred_fallthru
      _
    %v19 = vld [vmem:[%s0] sm:$0xff]
    %v20 = vld [vmem:[%s1] sm:$0xff]
    %s21 = smul.u32 0, 32
    %v22 = vstv %s21
    %v23 = vsub.s32 %v20, %v22
    %v24 = vlaneseq
    %v25 = vand.u32 %v24, 127
    %v26 = vld [vmem:[#allocation3] sm:$0xff]
    %27 = vset.pattern.permute.xlu0 0
    %28 = vperm.xlu0 %27, %v23
    %v29 = vpop.permute.xlu0 %28
    %vm30 = vcmp.eq.s32.totalorder %v25, %v29
    %v31 = vsel %vm30, %v19, 0.0
    %vm32 = vcmask 261120
    %v33 = vsel %vm32, %v31, 0.0
    %34 = vadd.xlane.f32.xlu0 %v33
    %v35 = vpop.xlane.xlu0 %34
    %v36 = vadd.f32 %v26, %v35
    %vm37 = vcmask 7168
    %38 = vst.msk [vmem:[#allocation3] sm:$0xff] %vm37, %v36
    %v39 = vld [vmem:[#allocation2] sm:$0xff]
    %v40 = vmul.f32 %v19, %v19
    %v41 = vsel %vm32, %v40, 0.0
    %42 = vadd.xlane.f32.xlu0 %v41
    %v43 = vpop.xlane.xlu0 %42
    %v44 = vadd.f32 %v39, %v43
    %45 = vst.msk [vmem:[#allocation2] sm:$0xff] %vm37, %v44
    // Predicated region
    $region14: #{tpu_custom_call.1} parent=1 // pred_check
      %p46 = pneg %p12
    $region15: #{tpu_custom_call.1} parent=1 // pred_check_branch
      %48 = sbr.rel (%p46) target = $region17
    $region16: #{tpu_custom_call.1} parent=1 // pred_region
      %v49 = vld [vmem:[#allocation2] sm:$0xff]
      %v50 = vmax.f32 %v49, 1e-24
      %v51 = vrsqrt.pop %v50
      %v52 = vld [vmem:[#allocation3] sm:$0xff]
      %v53 = vmul.f32 %v52, %v51
      %v54 = vadd.f32 %v53, 1e-05
      %v55 = vlog2.pop %v54
      %v56 = vmul.f32 %v55, 0.6931472
      %s57 = smul.u32 0, 8
      %v58 = vlaneseq
      %v59 = vshrl.u32 %v58, 7
      %v60 = vstv %s57
      %v61 = vadd.s32 %v60, %v59
      %vm62 = vcmp.lt.s32.totalorder %v61, 8
      %v63 = vsel %vm62, %v56, 0.0
      %v64 = vsel %vm37, %v63, 0.0
      %65 = vadd.xlane.f32.xlu0 %v64
      %v66 = vpop.xlane.xlu0 %65
      %v67 = vrot.slane %v66, 4
      %v68 = vadd.f32 %v66, %v67
      %v69 = vrot.slane %v68, 2
      %v70 = vadd.f32 %v68, %v69
      %v71 = vrot.slane %v70, 1
      %v72 = vadd.f32 %v70, %v71
      %s73 = vtos %v72
      %v74 = vstv %s73
      %75 = vst [vmem:[#allocation4] sm:$0xff] %v74
    $region17: #{tpu_custom_call.1} parent=1 // pred_fallthru
      _
    // Predicated region
    $region18: #{tpu_custom_call.1} parent=1 // pred_check
      _
    $region19: #{tpu_custom_call.1} parent=1 // pred_check_branch
      %77 = sbr.rel (0) target = $region21
    $region20: #{tpu_custom_call.1} parent=1 // pred_region
      %s79 = ssub.s32 128, 128
      %80 = vsyncadd [#allocation5], %s79
      %s82 = sshll.u32 [#allocation4], 4
      %s83 = int_to_ptr.vmem [resolvable:$true] %s82
      %85 = dma.vmem_to_hbm [thread:$0]  %s83, 128, %s2, [#allocation5]
    $region21: #{tpu_custom_call.1} parent=1 // pred_fallthru
      _
    // Predicated region
    $region22: #{tpu_custom_call.1} parent=1 // pred_check
      _
    $region23: #{tpu_custom_call.1} parent=1 // pred_check_branch
      %87 = sbr.rel (0) target = $region25
    $region24: #{tpu_custom_call.1} parent=1 // pred_region
      %88 = dma.done [#allocation5], 128
    $region25: #{tpu_custom_call.1} parent=1 // pred_fallthru
      _
    %89 = vsyncpa [#allocation5], 1

</llo_original>
